<compile_context>
chip_gen: v5e
topology: v5e:2x2
jax: 0.10.0
libtpu: 0.0.40
codegen_flags: <defaults>
</compile_context>

<pallas_src>
import functools
import math

import jax
import jax.numpy as jnp
from jax import lax
from jax.experimental import pallas as pl
from jax.experimental.pallas import tpu as pltpu

_LANE = 128
_SUB = 8
# Below this many elements a plain jnp reduction beats the fixed pallas_call dispatch +
# pipeline warm-up (the KD terms are typically tiny latents).
_PALLAS_MSE_MIN_ELEMS = 1 << 20


def _round_up(n, m):
    return (n + m - 1) // m * m


@functools.lru_cache(maxsize=1)
def _tpu_config():
    """Hardware-aware knobs: core split, VMEM input budget, tile rows, scoped-VMEM limit."""
    kind = ""
    try:
        kind = jax.devices()[0].device_kind.lower().replace(" ", "")
    except Exception:
        pass
    if "v7" in kind or "tpu7" in kind:
        # 2 TensorCores, 64 MiB VMEM per TC -> budget per core, shard the reduction axis.
        return {"n_cores": 2, "budget": 24 << 20, "tile_m": 2048, "vmem_limit": 48 << 20}
    if "v6" in kind or "trillium" in kind:
        # 1 TC, 128 MiB physical VMEM (32 MiB scoped default) -> big tiles + explicit limit.
        return {"n_cores": 1, "budget": 40 << 20, "tile_m": 2048, "vmem_limit": 64 << 20}
    if "v5lite" in kind or "v5e" in kind:
        # 1 TC, 16 MiB scoped default; ~512-1024 rows already amortize the per-step cost.
        return {"n_cores": 1, "budget": 10 << 20, "tile_m": 1024, "vmem_limit": 32 << 20}
    # Unknown chip: conservative settings that fit the default scoped-VMEM limit.
    return {"n_cores": 1, "budget": 8 << 20, "tile_m": 512, "vmem_limit": None}


def _core_semantics(n_cores):
    if n_cores > 1:
        core_parallel = getattr(pltpu, "CORE_PARALLEL", None)
        arbitrary = getattr(pltpu, "ARBITRARY", "arbitrary")
        if core_parallel is not None:
            return (core_parallel, arbitrary)
        return ("parallel", "arbitrary")
    return ("arbitrary", "arbitrary")


def _compiler_params(dimension_semantics, vmem_limit):
    kwargs = {"dimension_semantics": tuple(dimension_semantics)}
    if vmem_limit:
        kwargs["vmem_limit_bytes"] = int(vmem_limit)
    return pltpu.CompilerParams(**kwargs)


def _as_lane_rows(flat, pad_value):
    """1-D (N,) -> (M, 128) with M >= 8. Pads (tiny / uncommon case) with a neutral value."""
    n = flat.shape[0]
    n_pad = max(_round_up(n, _LANE), _SUB * _LANE)
    if n_pad != n:
        flat = jnp.pad(flat, (0, n_pad - n), constant_values=pad_value)
    return flat.reshape(n_pad // _LANE, _LANE)


def _as_lane_rows_batched(flat2d, pad_value):
    """(R, N) -> (R, M, 128) with M >= 8."""
    r, n = flat2d.shape
    n_pad = max(_round_up(n, _LANE), _SUB * _LANE)
    if n_pad != n:
        # TODO(synk): the ragged-lane case (N % 128 != 0) still pays a wrapper pad copy of
        # x_hat; an in-kernel lane mask on the tail block would avoid this extra HBM pass.
        flat2d = jnp.pad(flat2d, ((0, 0), (0, n_pad - n)), constant_values=pad_value)
    return flat2d.reshape(r, n_pad // _LANE, _LANE)


def _pick_tile(m, tile_m, row_bytes, budget):
    """tile rows (of 128 lanes): multiple of 8, capped by array size and VMEM budget."""
    tm = min(int(tile_m), (m // _SUB) * _SUB)
    cap = (budget // max(row_bytes, 1)) // _SUB * _SUB
    tm = min(tm, max(cap, _SUB))
    return max(_SUB, (tm // _SUB) * _SUB)


# --------------------------- per-recon MSE kernel ----------------------------
def _mse_kernel(t_ref, x_ref, o_ref, *, m_rows, tile_m, blocks_per_core, last_blk,
                need_mask):
    c = pl.program_id(0)            # core-split half of the reduction axis
    k = pl.program_id(1)            # reduction chunks ("arbitrary")

    @pl.when(k == 0)
    def _():
        o_ref[...] = jnp.zeros_like(o_ref)

    x = x_ref[...].astype(jnp.float32)                 # (R, tile_m, 128)
    t = t_ref[...].astype(jnp.float32)                 # (tile_m, 128)
    d = x - t[None, :, :]
    sq = d * d

    if need_mask:
        blk = c * blocks_per_core + k                  # unclamped global block index

        # Steady state: full blocks accumulate unmasked (keeps v7x on the HBM roofline).
        @pl.when(blk < last_blk)
        def _():
            o_ref[...] += jnp.sum(sq, axis=1)[None]

        # Tail / overflow blocks only: select-mask BEFORE accumulation (kills NaN/Inf from
        # out-of-range garbage); overflow blocks (clamped re-view of the last block) mask
        # to all-zero, contributing nothing.
        @pl.when(blk >= last_blk)
        def _():
            row = lax.broadcasted_iota(jnp.int32, (tile_m, _LANE), 0) + blk * tile_m
            masked = jnp.where((row < m_rows)[None, :, :], sq, 0.0)
            o_ref[...] += jnp.sum(masked, axis=1)[None]
    else:
        o_ref[...] += jnp.sum(sq, axis=1)[None]        # (1, R, 128)


def mse_per_recon(x_hat, target, *, tile_m=None, cfg=None):
    """mean((target[None] - x_hat)**2) over all dims except 0 -> shape [R]."""
    cfg = cfg or _tpu_config()
    tile_m = tile_m or cfg["tile_m"]
    r = x_hat.shape[0]
    n = math.prod(target.shape)
    assert math.prod(x_hat.shape[1:]) == n, "x_hat / target element count mismatch"

    # Zero-copy reshape in the common case (N multiple of 128); native dtype kept in HBM.
    x3 = _as_lane_rows_batched(x_hat.reshape(r, n), 0)     # (R, M, 128)
    t2 = _as_lane_rows(target.reshape(n), 0)               # (M, 128)
    m = x3.shape[1]

    x_item = jnp.dtype(x_hat.dtype).itemsize
    t_item = jnp.dtype(target.dtype).itemsize
    # Double-buffered inputs + one f32 upcast/temp block per 128-lane row.
    row_bytes = (2 * r * x_item + 2 * t_item + r * 4) * _LANE
    tm = _pick_tile(m, tile_m, row_bytes, cfg["budget"])

    k_total = pl.cdiv(m, tm)
    n_cores = max(1, min(cfg["n_cores"], k_total))
    k_per_core = pl.cdiv(k_total, n_cores)
    need_mask = (m % tm != 0) or (n_cores * k_per_core != k_total)
    last_blk = k_total - 1

    x_map = lambda c, k: (0, jnp.minimum(c * k_per_core + k, last_blk), 0)
    t_map = lambda c, k: (jnp.minimum(c * k_per_core + k, last_blk), 0)
    o_map = lambda c, k: (c, 0, 0)

    out = pl.pallas_call(
        functools.partial(_mse_kernel, m_rows=m, tile_m=tm,
                          blocks_per_core=k_per_core, last_blk=last_blk,
                          need_mask=need_mask),
        out_shape=jax.ShapeDtypeStruct((n_cores, r, _LANE), jnp.float32),
        grid_spec=pltpu.PrefetchScalarGridSpec(
            num_scalar_prefetch=0,
            grid=(n_cores, k_per_core),
            in_specs=[
                pl.BlockSpec((tm, _LANE), t_map),           # broadcast target chunk
                pl.BlockSpec((r, tm, _LANE), x_map),        # all recon rows of the chunk
            ],
            out_specs=pl.BlockSpec((1, r, _LANE), o_map),   # per-core resident accumulator
        ),
        compiler_params=_compiler_params(_core_semantics(n_cores), cfg["vmem_limit"]),
    )(t2, x3)
    return out.sum(axis=(0, 2)) / n


def mse_scalar(a, b, *, cfg=None):
    """mean((a - b)**2) -> scalar (torch mse_loss default reduction)."""
    n = math.prod(b.shape)
    if n < _PALLAS_MSE_MIN_ELEMS:
        # Tiny KD terms: a kernel launch + pipeline warm-up would dominate; use plain jnp.
        return jnp.mean((a.astype(jnp.float32) - b.astype(jnp.float32)) ** 2)
    return mse_per_recon(a.reshape(1, -1), b, cfg=cfg)[0]


# --------------------------- fused sum(log(p)) kernel -------------------------
def _logsum_kernel(*refs, rows_list, tile_list, last_list):
    num = len(rows_list)
    o_ref = refs[num]
    k = pl.program_id(0)
    k_total = pl.num_programs(0)

    @pl.when(k == 0)
    def _():
        o_ref[...] = jnp.zeros_like(o_ref)

    for i in range(num):                       # static unroll over the (few) tensors
        p_ref = refs[i]
        rows = rows_list[i]
        tm = tile_list[i]
        last = last_list[i]
        nb = last + 1
        ragged = (rows % tm) != 0

        def _accum(mask_tail, i=i, p_ref=p_ref, rows=rows, tm=tm):
            v = jnp.log(p_ref[...].astype(jnp.float32))        # (tm, 128)
            if mask_tail:
                row = lax.broadcasted_iota(jnp.int32, (tm, _LANE), 0) + k * tm
                v = jnp.where(row < rows, v, 0.0)              # select kills NaN from OOB
            o_ref[pl.ds(i, 1), :] += jnp.sum(v, axis=0, keepdims=True)

        if nb == k_total and not ragged:
            _accum(False)                                       # steady state: no mask
        elif not ragged:
            @pl.when(k <= last)                                 # skip overflow steps
            def _():
                _accum(False)
        else:
            @pl.when(k < last)                                  # full blocks, unmasked
            def _():
                _accum(False)

            @pl.when(k == last)                                 # only the tail block masks
            def _():
                _accum(True)


def log_sums(tensors, *, cfg=None):
    """sum(log(p)) for each tensor, fused into a single pallas_call -> shape [len(tensors)]."""
    cfg = cfg or _tpu_config()
    s = len(tensors)
    mats = []
    for t in tensors:
        flat = jnp.ravel(t)
        n = flat.shape[0]
        n_pad = max(_round_up(n, _LANE), _SUB * _LANE)
        if n_pad != n:
            flat = jnp.pad(flat, (0, n_pad - n), constant_values=1)   # log(1) = 0
        mats.append(flat.reshape(n_pad // _LANE, _LANE))              # native dtype kept

    # Split into as few grid steps as the VMEM budget allows (double-buffered inputs +
    # an f32 temp per block), with a per-tensor tile height (no pad-to-max-length).
    bytes_full = sum((2 * jnp.dtype(mat.dtype).itemsize + 4) * mat.shape[0] * _LANE
                     for mat in mats)
    k_total = max(1, -(-bytes_full // cfg["budget"]))
    tms, lasts, rows_list = [], [], []
    for mat in mats:
        rows = mat.shape[0]
        tm = _round_up(pl.cdiv(rows, k_total), _SUB)
        tm = min(tm, max(_SUB, (rows // _SUB) * _SUB))
        tms.append(tm)
        lasts.append(pl.cdiv(rows, tm) - 1)
        rows_list.append(rows)
    k_total = max(lasts) + 1

    in_specs = [pl.BlockSpec((tm, _LANE),
                             (lambda k, last=last: (jnp.minimum(k, last), 0)))
                for tm, last in zip(tms, lasts)]

    out = pl.pallas_call(
        functools.partial(_logsum_kernel, rows_list=tuple(rows_list),
                          tile_list=tuple(tms), last_list=tuple(lasts)),
        out_shape=jax.ShapeDtypeStruct((s, _LANE), jnp.float32),
        grid_spec=pltpu.PrefetchScalarGridSpec(
            num_scalar_prefetch=0,
            grid=(k_total,),
            in_specs=in_specs,
            out_specs=pl.BlockSpec((s, _LANE), lambda k: (0, 0)),
        ),
        compiler_params=_compiler_params(("arbitrary",), cfg["vmem_limit"]),
    )(*mats)
    return out.sum(axis=1)


# ----------------------------- forward (loss) ---------------------------------
def scalable_distilled_rd_loss(output, target, y_kd_enhanced, *, y_kd_base=None,
                               lmbda=None, lmbda_list=(0.75,), weight=255 ** 2,
                               gamma=0.5, weight_kd=1.0):
    # TODO(synk): encoder_enhanced / encoder_base are arbitrary external CNNs with no clean
    # Pallas equivalent; their outputs (y_kd_enhanced / y_kd_base) are taken as precomputed
    # inputs instead of being recomputed inside this function.
    b_img, _, h, w = target.shape
    num_pixels = b_img * h * w
    r = output["x_hat"].shape[0]
    cfg = _tpu_config()
    out = {}

    kd_enh = mse_scalar(output["y_hat"][1], y_kd_enhanced, cfg=cfg) * weight_kd
    out["kd_enh"] = kd_enh
    kd_base = None
    if y_kd_base is not None:                      # i.e. encoder_base is not None
        kd_base = mse_scalar(output["y_hat"][0], y_kd_base, cfg=cfg) * weight_kd
        out["kd_base"] = kd_base

    lmbda_arr = jnp.asarray(lmbda_list if lmbda is None else [lmbda], jnp.float32)
    assert lmbda_arr.shape[0] in (1, r), \
        "len(lmbda_list) must be 1 or equal the recon count (matches torch broadcasting)"

    # mse_loss(extend_images, x_hat, reduction='none').mean(dim=(1,2,3,4)); both torch
    # branches (repeat vs unsqueeze) reduce to broadcasting target[None] against x_hat.
    out["mse_loss"] = mse_per_recon(output["x_hat"], target, cfg=cfg)

    denominator = -math.log(2.0) * num_pixels
    likelihoods = output["likelihoods"]
    has_y_prog = "y_prog" in likelihoods
    like_tensors = [likelihoods["y"], likelihoods["z"]]
    if has_y_prog:
        like_tensors.append(likelihoods["y_prog"])
    sums = log_sums(like_tensors, cfg=cfg)         # single fused launch for all likelihoods
    logsum_y, logsum_z = sums[0], sums[1]

    out["bpp_hype"] = logsum_z / denominator
    # NOTE: the reference's `if 'z_prog' in list(out.keys())` branch is dead code
    # (it inspects out.keys(), which never contains 'z_prog'), so it is omitted.
    if has_y_prog:
        out["bpp_base"] = logsum_y / denominator
        out["bpp_scalable"] = sums[2] / denominator
    else:
        # y.squeeze(0).sum() == y.sum(), so the fused log-sum is reused directly.
        out["bpp_base"] = (1.0 - gamma) * kd_enh + gamma * logsum_y / denominator
        out["bpp_scalable"] = logsum_y / denominator * 0.0
    out["bpp_loss"] = out["bpp_scalable"] + out["bpp_base"] + r * out["bpp_hype"]

    rd_term = weight * jnp.mean(lmbda_arr * out["mse_loss"])
    if kd_base is not None:
        out["loss"] = (out["bpp_loss"] + rd_term + kd_enh * (lmbda_arr[-1] * gamma)
                       + kd_base * (lmbda_arr[0] * gamma))
    else:
        out["loss"] = out["bpp_loss"] + rd_term + kd_enh * (lmbda_arr[-1] * gamma)
    return out


if __name__ == "__main__":
    key = jax.random.PRNGKey(0)
    ks = jax.random.split(key, 9)

    B, C, H, W = 2, 3, 16, 16        # target NCHW
    R = 3                            # recon batch (exercises the "repeat" branch)
    Cy, hy, wy = 8, 4, 4             # latent y
    Cz, hz, wz = 4, 2, 2             # hyper-latent z

    target = jax.random.uniform(ks[0], (B, C, H, W), jnp.float32)
    x_hat = jax.random.uniform(ks[1], (R, B, C, H, W), jnp.float32)
    y_like = jax.random.uniform(ks[2], (1, B, Cy, hy, wy), jnp.float32, minval=0.05, maxval=1.0)
    z_like = jax.random.uniform(ks[3], (B, Cz, hz, wz), jnp.float32, minval=0.05, maxval=1.0)
    y_hat_base = jax.random.normal(ks[4], (B, Cy, hy, wy), jnp.float32)
    y_hat_enh = jax.random.normal(ks[5], (B, Cy, hy, wy), jnp.float32)
    y_kd_enh = jax.random.normal(ks[6], (B, Cy, hy, wy), jnp.float32)   # encoder_enhanced(target)
    y_kd_base = jax.random.normal(ks[7], (B, Cy, hy, wy), jnp.float32)  # encoder_base(target)
    y_prog_like = jax.random.uniform(ks[8], (B, Cy, hy, wy), jnp.float32, minval=0.05, maxval=1.0)

    weight, gamma, weight_kd = 255.0 ** 2, 0.5, 1.0
    lmbda = jnp.asarray([0.75], jnp.float32)

    def close(a, b):
        return jnp.allclose(a, b, rtol=2e-5, atol=1e-5)

    # ---------------- test 1: no encoder_base, no y_prog ----------------
    output = {"x_hat": x_hat,
              "y_hat": [y_hat_base, y_hat_enh],
              "likelihoods": {"y": y_like, "z": z_like}}
    out = scalable_distilled_rd_loss(output, target, y_kd_enh)
    out = jax.tree_util.tree_map(jax.block_until_ready, out)

    kd_enh_ref = jnp.mean((y_hat_enh - y_kd_enh) ** 2) * weight_kd
    ext = jnp.broadcast_to(target[None], x_hat.shape)
    mse_ref = jnp.mean((ext - x_hat) ** 2, axis=(1, 2, 3, 4))
    denom = -math.log(2.0) * (B * H * W)
    bpp_hype_ref = jnp.sum(jnp.log(z_like)) / denom
    bpp_base_ref = (1.0 - gamma) * kd_enh_ref + gamma * jnp.sum(jnp.log(jnp.squeeze(y_like, 0))) / denom
    bpp_scal_ref = jnp.sum(jnp.log(y_like)) / denom * 0.0
    bpp_loss_ref = bpp_scal_ref + bpp_base_ref + R * bpp_hype_ref
    loss_ref = bpp_loss_ref + weight * jnp.mean(lmbda * mse_ref) + kd_enh_ref * (lmbda[-1] * gamma)

    assert close(out["kd_enh"], kd_enh_ref)
    assert close(out["mse_loss"], mse_ref)
    assert close(out["bpp_hype"], bpp_hype_ref)
    assert close(out["bpp_base"], bpp_base_ref)
    assert close(out["bpp_scalable"], bpp_scal_ref)
    assert close(out["bpp_loss"], bpp_loss_ref)
    assert close(out["loss"], loss_ref)

    # ---------------- test 2: with encoder_base and y_prog ----------------
    output2 = {"x_hat": x_hat,
               "y_hat": [y_hat_base, y_hat_enh],
               "likelihoods": {"y": y_like, "z": z_like, "y_prog": y_prog_like}}
    out2 = scalable_distilled_rd_loss(output2, target, y_kd_enh, y_kd_base=y_kd_base)
    out2 = jax.tree_util.tree_map(jax.block_until_ready, out2)

    kd_base_ref = jnp.mean((y_hat_base - y_kd_base) ** 2) * weight_kd
    bpp_base2_ref = jnp.sum(jnp.log(y_like)) / denom
    bpp_scal2_ref = jnp.sum(jnp.log(y_prog_like)) / denom
    bpp_loss2_ref = bpp_scal2_ref + bpp_base2_ref + R * bpp_hype_ref
    loss2_ref = (bpp_loss2_ref + weight * jnp.mean(lmbda * mse_ref)
                 + kd_enh_ref * (lmbda[-1] * gamma) + kd_base_ref * (lmbda[0] * gamma))

    assert close(out2["kd_enh"], kd_enh_ref)
    assert close(out2["kd_base"], kd_base_ref)
    assert close(out2["mse_loss"], mse_ref)
    assert close(out2["bpp_hype"], bpp_hype_ref)
    assert close(out2["bpp_base"], bpp_base2_ref)
    assert close(out2["bpp_scalable"], bpp_scal2_ref)
    assert close(out2["bpp_loss"], bpp_loss2_ref)
    assert close(out2["loss"], loss2_ref)

    print("KERNEL_OK")
</pallas_src>

<mosaic_0001>
module attributes {stable_mosaic.version = 11 : i64} {
  func.func @_mse_kernel(%arg0: i32, %arg1: i32, %arg2: memref<8x128xf32, #tpu.memory_space<vmem>>, %arg3: memref<3x8x128xf32, #tpu.memory_space<vmem>>, %arg4: memref<1x3x128xf32, #tpu.memory_space<vmem>>) attributes {dimension_semantics = [#tpu.dimension_semantics<arbitrary>, #tpu.dimension_semantics<arbitrary>], iteration_bounds = array<i64: 1, 2>, scalar_prefetch = 0 : i64, scratch_operands = 0 : i64, tpu.core_type = #tpu.core_type<tc>, window_params = [{transform_indices = @transform_0, window_bounds = array<i64: 8, 128>}, {transform_indices = @transform_1, window_bounds = array<i64: 3, 8, 128>}, {transform_indices = @transform_2, window_bounds = array<i64: 1, 3, 128>}]} {
    %c0_i32 = arith.constant 0 : i32
    %0 = arith.cmpi eq, %arg1, %c0_i32 : i32
    %1 = arith.extui %0 : i1 to i32
    %c0_i32_0 = arith.constant 0 : i32
    %2 = arith.cmpi ne, %1, %c0_i32_0 : i32
    scf.if %2 {
      %cst = arith.constant 0.000000e+00 : f32
      %17 = vector.broadcast %cst : f32 to vector<1x3x128xf32>
      %c0_8 = arith.constant 0 : index
      %c0_9 = arith.constant 0 : index
      %c0_10 = arith.constant 0 : index
      %18 = vector.load %arg4[%c0_8, %c0_9, %c0_10] : memref<1x3x128xf32, #tpu.memory_space<vmem>>, vector<1x3x128xf32>
      tpu.vector_store %arg4[%c0_8, %c0_9, %c0_10], %17 {strides = array<i32>} : memref<1x3x128xf32, #tpu.memory_space<vmem>>, vector<1x3x128xf32>,
    } else {
    }
    %c0 = arith.constant 0 : index
    %c0_1 = arith.constant 0 : index
    %c0_2 = arith.constant 0 : index
    %3 = vector.load %arg3[%c0, %c0_1, %c0_2] : memref<3x8x128xf32, #tpu.memory_space<vmem>>, vector<3x8x128xf32>
    %c0_3 = arith.constant 0 : index
    %c0_4 = arith.constant 0 : index
    %4 = vector.load %arg2[%c0_3, %c0_4] : memref<8x128xf32, #tpu.memory_space<vmem>>, vector<8x128xf32>
    %5 = vector.shape_cast %4 : vector<8x128xf32> to vector<1x8x128xf32>
    %6 = vector.broadcast %5 : vector<1x8x128xf32> to vector<3x8x128xf32>
    %7 = arith.subf %3, %6 : vector<3x8x128xf32>
    %8 = arith.mulf %7, %7 : vector<3x8x128xf32>
    %c2_i32 = arith.constant 2 : i32
    %9 = arith.muli %arg0, %c2_i32 : i32
    %10 = arith.addi %9, %arg1 : i32
    %c1_i32 = arith.constant 1 : i32
    %11 = arith.cmpi slt, %10, %c1_i32 : i32
    %12 = arith.extui %11 : i1 to i32
    %c0_i32_5 = arith.constant 0 : i32
    %13 = arith.cmpi ne, %12, %c0_i32_5 : i32
    scf.if %13 {
      %c0_8 = arith.constant 0 : index
      %c0_9 = arith.constant 0 : index
      %c0_10 = arith.constant 0 : index
      %17 = vector.load %arg4[%c0_8, %c0_9, %c0_10] : memref<1x3x128xf32, #tpu.memory_space<vmem>>, vector<1x3x128xf32>
      %cst = arith.constant dense<0.000000e+00> : vector<3x128xf32>
      %18 = vector.multi_reduction <add>, %8, %cst [1] : vector<3x8x128xf32> to vector<3x128xf32>
      %19 = vector.shape_cast %18 : vector<3x128xf32> to vector<1x3x128xf32>
      %20 = arith.addf %17, %19 : vector<1x3x128xf32>
      %c0_11 = arith.constant 0 : index
      %c0_12 = arith.constant 0 : index
      %c0_13 = arith.constant 0 : index
      %21 = vector.load %arg4[%c0_11, %c0_12, %c0_13] : memref<1x3x128xf32, #tpu.memory_space<vmem>>, vector<1x3x128xf32>
      tpu.vector_store %arg4[%c0_11, %c0_12, %c0_13], %20 {strides = array<i32>} : memref<1x3x128xf32, #tpu.memory_space<vmem>>, vector<1x3x128xf32>,
    } else {
    }
    %c1_i32_6 = arith.constant 1 : i32
    %14 = arith.cmpi sge, %10, %c1_i32_6 : i32
    %15 = arith.extui %14 : i1 to i32
    %c0_i32_7 = arith.constant 0 : i32
    %16 = arith.cmpi ne, %15, %c0_i32_7 : i32
    scf.if %16 {
      %17 = tpu.iota {dimensions = array<i32: 0>} : vector<8x128xi32>
      %c8_i32 = arith.constant 8 : i32
      %18 = arith.muli %10, %c8_i32 : i32
      %19 = vector.broadcast %18 : i32 to vector<8x128xi32>
      %20 = arith.addi %17, %19 : vector<8x128xi32>
      %c12_i32 = arith.constant 12 : i32
      %21 = vector.broadcast %c12_i32 : i32 to vector<8x128xi32>
      %22 = arith.cmpi slt, %20, %21 : vector<8x128xi32>
      %23 = vector.shape_cast %22 : vector<8x128xi1> to vector<1x8x128xi1>
      %cst = arith.constant 0.000000e+00 : f32
      %24 = vector.shape_cast %23 : vector<1x8x128xi1> to vector<1x8x128xi1>
      %25 = vector.broadcast %24 : vector<1x8x128xi1> to vector<3x8x128xi1>
      %26 = vector.broadcast %cst : f32 to vector<3x8x128xf32>
      %27 = arith.select %25, %8, %26 : vector<3x8x128xi1>, vector<3x8x128xf32>
      %c0_8 = arith.constant 0 : index
      %c0_9 = arith.constant 0 : index
      %c0_10 = arith.constant 0 : index
      %28 = vector.load %arg4[%c0_8, %c0_9, %c0_10] : memref<1x3x128xf32, #tpu.memory_space<vmem>>, vector<1x3x128xf32>
      %cst_11 = arith.constant dense<0.000000e+00> : vector<3x128xf32>
      %29 = vector.multi_reduction <add>, %27, %cst_11 [1] : vector<3x8x128xf32> to vector<3x128xf32>
      %30 = vector.shape_cast %29 : vector<3x128xf32> to vector<1x3x128xf32>
      %31 = arith.addf %28, %30 : vector<1x3x128xf32>
      %c0_12 = arith.constant 0 : index
      %c0_13 = arith.constant 0 : index
      %c0_14 = arith.constant 0 : index
      %32 = vector.load %arg4[%c0_12, %c0_13, %c0_14] : memref<1x3x128xf32, #tpu.memory_space<vmem>>, vector<1x3x128xf32>
      tpu.vector_store %arg4[%c0_12, %c0_13, %c0_14], %31 {strides = array<i32>} : memref<1x3x128xf32, #tpu.memory_space<vmem>>, vector<1x3x128xf32>,
    } else {
    }
    return
  }
  func.func @transform_0(%arg0: i32, %arg1: i32) -> (i32, i32) {
    %c2_i32 = arith.constant 2 : i32
    %0 = arith.muli %arg0, %c2_i32 : i32
    %1 = arith.addi %0, %arg1 : i32
    %c1_i32 = arith.constant 1 : i32
    %2 = arith.minsi %1, %c1_i32 : i32
    %c0_i32 = arith.constant 0 : i32
    %c0_i32_0 = arith.constant 0 : i32
    return %2, %c0_i32 : i32, i32
  }
  func.func @transform_1(%arg0: i32, %arg1: i32) -> (i32, i32, i32) {
    %c2_i32 = arith.constant 2 : i32
    %0 = arith.muli %arg0, %c2_i32 : i32
    %1 = arith.addi %0, %arg1 : i32
    %c1_i32 = arith.constant 1 : i32
    %2 = arith.minsi %1, %c1_i32 : i32
    %c0_i32 = arith.constant 0 : i32
    %c0_i32_0 = arith.constant 0 : i32
    %c0_i32_1 = arith.constant 0 : i32
    return %c0_i32, %2, %c0_i32_0 : i32, i32, i32
  }
  func.func @transform_2(%arg0: i32, %arg1: i32) -> (i32, i32, i32) {
    %c0_i32 = arith.constant 0 : i32
    %c0_i32_0 = arith.constant 0 : i32
    %c0_i32_1 = arith.constant 0 : i32
    return %arg0, %c0_i32, %c0_i32_0 : i32, i32, i32
  }
}

</mosaic_0001>

<llo_original>
// kernel: tpu_custom_call.1
$region0: #{tpu_custom_call.1}
  #allocation0 [shape = 'u32[]', space=smem, size = 0x4, offset = 0x4, fixed_abs, tag = 'smem constant byte address 0x4 - core index']
  #allocation1 [shape = 'u32[72,128]{1,0:T(1,128)}', space=vmem, size = 0x9000, scoped, tag = 'internal scratch']
  %s0 = inlined_call_operand.hbm [shape: f32[12,128], index: 0, kind: input, shape index: {}]
  %s1 = inlined_call_operand.hbm [shape: f32[3,12,128], index: 1, kind: input, shape index: {}]
  %s2 = inlined_call_operand.vmem [shape: f32[1,3,128], index: 2, kind: output, shape index: {}]
  %s3 = sld [smem:[#allocation0]]
  $region61: #{tpu_custom_call.1} parent=0
    _
  %s5 = ssub.s32 1, %s3
  %s6 = scalar_select 0, %s5, %s3
  $region1: #{tpu_custom_call.1} parent=0
    #allocation2 [shape = 'u8[8192]{0}', space=vmem, size = 0x2000, scoped, tag = 'input window, operand 0']
    #allocation3 [shape = 's32[2]{0}', space=sflag, size = 0x8, scoped, tag = 'scoped memory for tpu_custom_call.1']
    #allocation4 [shape = 'u8[24576]{0}', space=vmem, size = 0x6000, scoped, tag = 'input window, operand 1']
    #allocation5 [shape = 's32[2]{0}', space=sflag, size = 0x8, scoped, tag = 'scoped memory for tpu_custom_call.1']
    %7 = vsyncpa [#allocation3], 0
    %s8 = scalar_lea.sflag [#allocation3], 1
    %9 = vsyncpa %s8, 0
    %10 = vsyncpa [#allocation5], 0
    %s11 = scalar_lea.sflag [#allocation5], 1
    %12 = vsyncpa %s11, 0
    loop: start=0, step=1, limit=4
    $region2: #{tpu_custom_call.1} parent=1 // loop_pre_header
      _
    $region3: #{tpu_custom_call.1} parent=1 // loop_header
      %s14 = sphi 0, %s18
      %p15 = scmp.ge.s32.totalorder %s14, 4
      %s21 = sphi 0, %s33
      %s22 = sphi 0, %s29
      %s23 = sphi 0, %s21
      %s24 = sphi 0, %s22
      %s25 = sphi 0, %s23
      %s26 = sphi 0, %s24
      %s44 = sphi 0, %s46
      %s47 = sphi 0, %s44
      %s48 = sphi 0, %s47
      %s64 = sphi 0, %s48
      %s78 = sphi 0, %s80
      %s81 = sphi 0, %s78
      %s82 = sphi 0, %s81
      %s98 = sphi 0, %s82
      %s104 = sphi 0, %s106
      %s107 = sphi 0, %s104
      %s108 = sphi 0, %s107
      %s124 = sphi 0, %s108
    $region4: #{tpu_custom_call.1} parent=1 // loop_header_branch
      %17 = sbr.rel (%p15) target = $region8
    $region5: #{tpu_custom_call.1} parent=1 // loop_body
      %s19 = ssub.s32 %s14, 1
      %s20 = ssub.s32 %s14, 2
      %s27 = sadd.s32 1, %s22
      %p28 = scmp.ge.s32.totalorder %s27, 2
      %s29 = scalar_select %p28, 0, %s27
      %s30 = sadd.s32 1, %s21
      %s31 = scalar_select %p28, %s30, %s21
      %p32 = scmp.ge.s32.totalorder %s31, 1
      %s33 = scalar_select %p32, 0, %s31
      %s34 = smul.u32 %s21, 2
      %s35 = sadd.s32 %s34, %s22
      %p36 = scmp.lt.s32.totalorder %s35, 1
      %s37 = scalar_select %p36, %s35, 1
      %s38 = smul.u32 %s33, 2
      %s39 = sadd.s32 %s38, %s29
      %p40 = scmp.lt.s32.totalorder %s39, 1
      %s41 = scalar_select %p40, %s39, 1
      %s42 = ssub.s32 %s37, %s41
      %p43 = scmp.eq.s32.totalorder %s42, 0
      %s45 = sadd.s32 %s44, 1
      %s46 = scalar_select %p43, %s44, %s45
      %p49 = pneg %p43
      %p50 = scmp.eq.s32.totalorder %s14, 1
      %p51 = por %p49, %p50
      %p52 = scmp.ne.s32.totalorder %s44, %s47
      %p53 = scmp.eq.s32.totalorder %s14, 0
      %p54 = por %p52, %p53
      %p55 = scmp.ne.s32.totalorder %s44, %s47
      %p56 = scmp.eq.s32.totalorder %s19, 1
      %p57 = por %p55, %p56
      %p58 = scmp.ne.s32.totalorder %s47, %s48
      %p59 = scmp.eq.s32.totalorder %s19, 0
      %p60 = por %p58, %p59
      %p61 = scmp.ne.s32.totalorder %s47, %s48
      %p62 = scmp.eq.s32.totalorder %s20, 1
      %p63 = por %p61, %p62
      %p65 = scmp.ne.s32.totalorder %s48, %s64
      %p66 = scmp.eq.s32.totalorder %s20, 0
      %p67 = por %p65, %p66
      %s68 = smul.u32 %s21, 2
      %s69 = sadd.s32 %s68, %s22
      %p70 = scmp.lt.s32.totalorder %s69, 1
      %s71 = scalar_select %p70, %s69, 1
      %s72 = smul.u32 %s33, 2
      %s73 = sadd.s32 %s72, %s29
      %p74 = scmp.lt.s32.totalorder %s73, 1
      %s75 = scalar_select %p74, %s73, 1
      %s76 = ssub.s32 %s71, %s75
      %p77 = scmp.eq.s32.totalorder %s76, 0
      %s79 = sadd.s32 %s78, 1
      %s80 = scalar_select %p77, %s78, %s79
      %p83 = pneg %p77
      %p84 = scmp.eq.s32.totalorder %s14, 1
      %p85 = por %p83, %p84
      %p86 = scmp.ne.s32.totalorder %s78, %s81
      %p87 = scmp.eq.s32.totalorder %s14, 0
      %p88 = por %p86, %p87
      %p89 = scmp.ne.s32.totalorder %s78, %s81
      %p90 = scmp.eq.s32.totalorder %s19, 1
      %p91 = por %p89, %p90
      %p92 = scmp.ne.s32.totalorder %s81, %s82
      %p93 = scmp.eq.s32.totalorder %s19, 0
      %p94 = por %p92, %p93
      %p95 = scmp.ne.s32.totalorder %s81, %s82
      %p96 = scmp.eq.s32.totalorder %s20, 1
      %p97 = por %p95, %p96
      %p99 = scmp.ne.s32.totalorder %s82, %s98
      %p100 = scmp.eq.s32.totalorder %s20, 0
      %p101 = por %p99, %p100
      %s102 = ssub.s32 %s21, %s33
      %p103 = scmp.eq.s32.totalorder %s102, 0
      %s105 = sadd.s32 %s104, 1
      %s106 = scalar_select %p103, %s104, %s105
      %p109 = pneg %p103
      %p110 = scmp.eq.s32.totalorder %s14, 1
      %p111 = por %p109, %p110
      %p112 = scmp.ne.s32.totalorder %s104, %s107
      %p113 = scmp.eq.s32.totalorder %s14, 0
      %p114 = por %p112, %p113
      %p115 = scmp.ne.s32.totalorder %s104, %s107
      %p116 = scmp.eq.s32.totalorder %s19, 1
      %p117 = por %p115, %p116
      %p118 = scmp.ne.s32.totalorder %s107, %s108
      %p119 = scmp.eq.s32.totalorder %s19, 0
      %p120 = por %p118, %p119
      %p121 = scmp.ne.s32.totalorder %s107, %s108
      %p122 = scmp.eq.s32.totalorder %s20, 1
      %p123 = por %p121, %p122
      %p125 = scmp.ne.s32.totalorder %s108, %s124
      %p126 = scmp.eq.s32.totalorder %s20, 0
      %p127 = por %p125, %p126
      %p128 = scmp.le.s32.totalorder 1, %s14
      %p129 = scmp.lt.s32.totalorder %s14, 3
      %p130 = pnand %p128, %p129
      %p131 = pneg %p130
      // Predicated region
      $region9: #{tpu_custom_call.1} parent=5 // pred_check
        _
      $region10: #{tpu_custom_call.1} parent=5 // pred_check_branch
        %133 = sbr.rel (%p130) target = $region12
      $region11: #{tpu_custom_call.1} parent=5 // pred_region
        %s134 = ssub.s32 %s14, 1
      $region12: #{tpu_custom_call.1} parent=5 // pred_fallthru
        _
      %p135 = scmp.lt.s32.totalorder %s14, 2
      // Predicated region
      $region13: #{tpu_custom_call.1} parent=5 // pred_check
        %p136 = pneg %p135
      $region14: #{tpu_custom_call.1} parent=5 // pred_check_branch
        %138 = sbr.rel (%p136) target = $region16
      $region15: #{tpu_custom_call.1} parent=5 // pred_region
        // Predicated region
        $region17: #{tpu_custom_call.1} parent=15 // pred_check
          %p139 = pneg %p54
        $region18: #{tpu_custom_call.1} parent=15 // pred_check_branch
          %141 = sbr.rel (%p139) target = $region20
        $region19: #{tpu_custom_call.1} parent=15 // pred_region
          %s142 = sand.u32 %s44, 1
          %s143 = scalar_lea.sflag [#allocation3], %s142
          %s144 = sand.u32 %s44, 1
          %s145 = smul.addr %s144, 8
          %s146 = scalar_lea.vmem [#allocation2], %s145
          %s147 = smul.u32 %s21, 2
          %s148 = sadd.s32 %s147, %s22
          %p149 = scmp.lt.s32.totalorder %s148, 1
          %s150 = scalar_select %p149, %s148, 1
          %152 = vsyncadd %s143, 0
          %s153 = smul.addr %s150, 8
          %s154 = scalar_lea.hbm %s0, %s153
          %s156 = sshll.u32 %s154, 4
          %s157 = int_to_ptr.hbm [resolvable:$true] %s156
          %s158 = sshll.u32 %s146, 4
          %s159 = int_to_ptr.vmem [resolvable:$true] %s158
          %161 = dma.hbm_to_vmem [thread:$0]  %s157, 128, %s159, %s143
        $region20: #{tpu_custom_call.1} parent=15 // pred_fallthru
          _
        // Predicated region
        $region21: #{tpu_custom_call.1} parent=15 // pred_check
          %p162 = pneg %p88
        $region22: #{tpu_custom_call.1} parent=15 // pred_check_branch
          %164 = sbr.rel (%p162) target = $region24
        $region23: #{tpu_custom_call.1} parent=15 // pred_region
          %s165 = sand.u32 %s78, 1
          %s166 = scalar_lea.sflag [#allocation5], %s165
          %s167 = sand.u32 %s78, 1
          %s168 = smul.addr %s167, 24
          %s169 = scalar_lea.vmem [#allocation4], %s168
          %s170 = smul.u32 %s21, 2
          %s171 = sadd.s32 %s170, %s22
          %p172 = scmp.lt.s32.totalorder %s171, 1
          %s173 = scalar_select %p172, %s171, 1
          %175 = vsyncadd %s166, 0
          %s176 = smul.addr %s173, 8
          %s177 = scalar_lea.hbm %s1, %s176
          %s178 = sshll.u32 %s177, 4
          %s179 = int_to_ptr.hbm [resolvable:$true] %s178
          %s180 = sshll.u32 %s169, 4
          %s181 = int_to_ptr.vmem [resolvable:$true] %s180
          %186 = dma.hbm_to_vmem [thread:$0]  %s179, 384, %s181, %s166, 256, 128, 8
        $region24: #{tpu_custom_call.1} parent=15 // pred_fallthru
          _
      $region16: #{tpu_custom_call.1} parent=5 // pred_fallthru
        _
      %p187 = scmp.le.s32.totalorder 1, %s14
      %p188 = scmp.lt.s32.totalorder %s14, 3
      %p189 = pnand %p187, %p188
      %p190 = pneg %p189
      // Predicated region
      $region25: #{tpu_custom_call.1} parent=5 // pred_check
        _
      $region26: #{tpu_custom_call.1} parent=5 // pred_check_branch
        %192 = sbr.rel (%p189) target = $region28
      $region27: #{tpu_custom_call.1} parent=5 // pred_region
        %s193 = ssub.s32 %s14, 1
        %s194 = sand.u32 %s47, 1
        %s195 = scalar_lea.sflag [#allocation3], %s194
        %s196 = sand.u32 %s47, 1
        %s197 = smul.addr %s196, 8
        %s198 = scalar_lea.vmem [#allocation2], %s197
        // Predicated region
        $region29: #{tpu_custom_call.1} parent=27 // pred_check
          %p199 = pneg %p60
        $region30: #{tpu_custom_call.1} parent=27 // pred_check_branch
          %201 = sbr.rel (%p199) target = $region32
        $region31: #{tpu_custom_call.1} parent=27 // pred_region
          %203 = dma.done %s195, 128
        $region32: #{tpu_custom_call.1} parent=27 // pred_fallthru
          _
        %s204 = sand.u32 %s81, 1
        %s205 = scalar_lea.sflag [#allocation5], %s204
        %s206 = sand.u32 %s81, 1
        %s207 = smul.addr %s206, 24
        %s208 = scalar_lea.vmem [#allocation4], %s207
        // Predicated region
        $region33: #{tpu_custom_call.1} parent=27 // pred_check
          %p209 = pneg %p94
        $region34: #{tpu_custom_call.1} parent=27 // pred_check_branch
          %211 = sbr.rel (%p209) target = $region36
        $region35: #{tpu_custom_call.1} parent=27 // pred_region
          %213 = dma.done %s205, 384
        $region36: #{tpu_custom_call.1} parent=27 // pred_fallthru
          _
        %s214 = sand.u32 %s47, 1
        %s215 = scalar_lea.sflag [#allocation3], %s214
        %s216 = sand.u32 %s47, 1
        %s217 = smul.addr %s216, 8
        %s218 = scalar_lea.vmem [#allocation2], %s217
        %p219 = pneg %p60
        %p220 = pneg %p57
        %s221 = sand.u32 %s81, 1
        %s222 = scalar_lea.sflag [#allocation5], %s221
        %s223 = sand.u32 %s81, 1
        %s224 = smul.addr %s223, 24
        %s225 = scalar_lea.vmem [#allocation4], %s224
        %p226 = pneg %p94
        %p227 = pneg %p91
        %p228 = pneg %p120
        %p229 = pneg %p117
        %p230 = scmp.lt.s32.totalorder %s23, 0
        %s231 = scalar_select %p230, %s23, 0
        %s232 = smul.addr %s231, 4
        %s233 = scalar_lea.vmem %s2, %s232
        %s234 = smul.u32 %s23, 2
        %s235 = sadd.s32 %s234, %s24
        %p236 = scmp.lt.s32.totalorder %s235, 1
        %s237 = scalar_select %p236, %s235, 1
        %s238 = smul.u32 %s23, 2
        %s239 = sadd.s32 %s238, %s24
        %p240 = scmp.lt.s32.totalorder %s239, 1
        %s241 = scalar_select %p240, %s239, 1
        %p242 = scmp.lt.s32.totalorder %s23, 0
        %s243 = scalar_select %p242, %s23, 0
        %s244 = smul.addr %s243, 4
        %s245 = scalar_lea.vmem %s2, %s244
        %p246 = scmp.eq.s32.totalorder %s24, 0
        // Predicated region
        $region37: #{tpu_custom_call.1} parent=27 // pred_check
          %p247 = pneg %p246
        $region38: #{tpu_custom_call.1} parent=27 // pred_check_branch
          %249 = sbr.rel (%p247) target = $region40
        $region39: #{tpu_custom_call.1} parent=27 // pred_region
          %250 = vst [vmem:[%s245] sm:$0x7] 0.0
        $region40: #{tpu_custom_call.1} parent=27 // pred_fallthru
          _
        %v251 = vld [vmem:[%s208] sm:$0xff]
        %v252 = vld [vmem:[%s208 + $0x8] sm:$0xff]
        %v253 = vld [vmem:[%s208 + $0x10] sm:$0xff]
        %v254 = vld [vmem:[%s198] sm:$0xff]
        %v255 = vsub.f32 %v251, %v254
        %v256 = vsub.f32 %v252, %v254
        %v257 = vsub.f32 %v253, %v254
        %v258 = vmul.f32 %v255, %v255
        %v259 = vmul.f32 %v256, %v256
        %v260 = vmul.f32 %v257, %v257
        %s261 = smul.u32 %s23, 2
        %s262 = sadd.s32 %s261, %s24
        %p263 = scmp.lt.s32.totalorder %s262, 1
        // Predicated region
        $region41: #{tpu_custom_call.1} parent=27 // pred_check
          %p264 = pneg %p263
        $region42: #{tpu_custom_call.1} parent=27 // pred_check_branch
          %266 = sbr.rel (%p264) target = $region44
        $region43: #{tpu_custom_call.1} parent=27 // pred_region
          %v267 = vld [vmem:[%s245] sm:$0x7]
          %v268 = vrot.slane %v258, 4
          %v269 = vadd.f32 %v258, %v268
          %v270 = vrot.slane %v269, 2
          %v271 = vadd.f32 %v269, %v270
          %v272 = vrot.slane %v271, 1
          %v273 = vadd.f32 %v271, %v272
          %v274 = vrot.slane %v259, 4
          %v275 = vadd.f32 %v259, %v274
          %v276 = vrot.slane %v275, 2
          %v277 = vadd.f32 %v275, %v276
          %v278 = vrot.slane %v277, 1
          %v279 = vadd.f32 %v277, %v278
          %v280 = vrot.slane %v260, 4
          %v281 = vadd.f32 %v260, %v280
          %v282 = vrot.slane %v281, 2
          %v283 = vadd.f32 %v281, %v282
          %v284 = vrot.slane %v283, 1
          %v285 = vadd.f32 %v283, %v284
          %vm289 = vcmask 1041409
          %v290 = vsel %vm289, %v279, %v273
          %vm291 = vcmask 1042434
          %v292 = vsel %vm291, %v285, %v290
          %v294 = vadd.f32 %v267, %v292
          %295 = vst [vmem:[%s245] sm:$0x7] %v294
        $region44: #{tpu_custom_call.1} parent=27 // pred_fallthru
          _
        %p296 = scmp.ge.s32.totalorder %s262, 1
        // Predicated region
        $region45: #{tpu_custom_call.1} parent=27 // pred_check
          %p297 = pneg %p296
        $region46: #{tpu_custom_call.1} parent=27 // pred_check_branch
          %299 = sbr.rel (%p297) target = $region48
        $region47: #{tpu_custom_call.1} parent=27 // pred_region
          %v300 = vlaneseq
          %v301 = vshrl.u32 %v300, 7
          %s302 = smul.u32 %s262, 8
          %v303 = vstv %s302
          %v304 = vadd.s32 %v301, %v303
          %vm305 = vcmp.lt.s32.totalorder %v304, 12
          %v306 = vsel %vm305, 1, 0
          %vm307 = vcmp.eq.s32.totalorder %v306, 1
          %v308 = vsel %vm307, %v258, 0.0
          %v309 = vsel %vm307, %v259, 0.0
          %v310 = vsel %vm307, %v260, 0.0
          %v311 = vld [vmem:[%s245] sm:$0x7]
          %v312 = vrot.slane %v308, 4
          %v313 = vadd.f32 %v308, %v312
          %v314 = vrot.slane %v313, 2
          %v315 = vadd.f32 %v313, %v314
          %v316 = vrot.slane %v315, 1
          %v317 = vadd.f32 %v315, %v316
          %v318 = vrot.slane %v309, 4
          %v319 = vadd.f32 %v309, %v318
          %v320 = vrot.slane %v319, 2
          %v321 = vadd.f32 %v319, %v320
          %v322 = vrot.slane %v321, 1
          %v323 = vadd.f32 %v321, %v322
          %v324 = vrot.slane %v310, 4
          %v325 = vadd.f32 %v310, %v324
          %v326 = vrot.slane %v325, 2
          %v327 = vadd.f32 %v325, %v326
          %v328 = vrot.slane %v327, 1
          %v329 = vadd.f32 %v327, %v328
          %vm333 = vcmask 1041409
          %v334 = vsel %vm333, %v323, %v317
          %vm335 = vcmask 1042434
          %v336 = vsel %vm335, %v329, %v334
          %v338 = vadd.f32 %v311, %v336
          %339 = vst [vmem:[%s245] sm:$0x7] %v338
        $region48: #{tpu_custom_call.1} parent=27 // pred_fallthru
          _
        %p340 = scmp.lt.s32.totalorder %s23, 0
        %s341 = scalar_select %p340, %s23, 0
        %s342 = smul.addr %s341, 4
        %s343 = scalar_lea.vmem %s2, %s342
        // Predicated region
        $region49: #{tpu_custom_call.1} parent=27 // pred_check
          %p344 = pneg %p117
        $region50: #{tpu_custom_call.1} parent=27 // pred_check_branch
          %346 = sbr.rel (%p344) target = $region52
        $region51: #{tpu_custom_call.1} parent=27 // pred_region
          _
        $region52: #{tpu_custom_call.1} parent=27 // pred_fallthru
          _
        // Predicated region
        $region53: #{tpu_custom_call.1} parent=27 // pred_check
          %p347 = pneg %p117
        $region54: #{tpu_custom_call.1} parent=27 // pred_check_branch
          %349 = sbr.rel (%p347) target = $region56
        $region55: #{tpu_custom_call.1} parent=27 // pred_region
          %p350 = scmp.lt.s32.totalorder %s23, 0
          %s351 = scalar_select %p350, %s23, 0
          %s352 = smul.addr %s351, 4
          %s353 = scalar_lea.vmem %s2, %s352
        $region56: #{tpu_custom_call.1} parent=27 // pred_fallthru
          _
      $region28: #{tpu_custom_call.1} parent=5 // pred_fallthru
        _
      %p354 = scmp.le.s32.totalorder 2, %s14
      // Predicated region
      $region57: #{tpu_custom_call.1} parent=5 // pred_check
        %p355 = pneg %p354
      $region58: #{tpu_custom_call.1} parent=5 // pred_check_branch
        %357 = sbr.rel (%p355) target = $region60
      $region59: #{tpu_custom_call.1} parent=5 // pred_region
        %s358 = ssub.s32 %s14, 2
      $region60: #{tpu_custom_call.1} parent=5 // pred_fallthru
        _
    $region6: #{tpu_custom_call.1} parent=1 // loop_footer
      %s18 = sadd.s32 1, %s14
    $region7: #{tpu_custom_call.1} parent=1 // loop_footer_branch
      %13 = sbr.rel target = $region3
    $region8: #{tpu_custom_call.1} parent=1 // loop_exit
      _
    %359 = vsyncpa [#allocation3], 1
    %s360 = scalar_lea.sflag [#allocation3], 1
    %361 = vsyncpa %s360, 1
    %362 = vsyncpa [#allocation5], 1
    %s363 = scalar_lea.sflag [#allocation5], 1
    %364 = vsyncpa %s363, 1

</llo_original>
